<compile_context>
chip_gen: v7x
topology: tpu7x:2x2x1
jax: 0.10.0
libtpu: 0.0.40
codegen_flags: <defaults>
</compile_context>

<pallas_src>
import functools

import jax
import jax.numpy as jnp
from jax.experimental import pallas as pl
from jax.experimental.pallas import tpu as pltpu


def _scalar_mix_kernel(w_ref, *refs, n_layers):
    # w_ref:  SMEM (n_layers,) float32  -- gamma * softmax(weights), pre-folded
    # refs:   n_layers VMEM tiles (tile_rows, tile_h), then the output tile.
    x_refs = refs[:n_layers]
    o_ref = refs[n_layers]

    # Two interleaved accumulator chains (even/odd layers) so the unrolled
    # convert/mul/add sequence is not one long serial VALU dependency chain.
    acc0 = w_ref[0] * x_refs[0][...].astype(jnp.float32)
    acc1 = None
    if n_layers > 1:
        acc1 = w_ref[1] * x_refs[1][...].astype(jnp.float32)
    for k in range(2, n_layers):
        if k % 2 == 0:
            acc0 = acc0 + w_ref[k] * x_refs[k][...].astype(jnp.float32)
        else:
            acc1 = acc1 + w_ref[k] * x_refs[k][...].astype(jnp.float32)
    acc = acc0 if acc1 is None else acc0 + acc1
    o_ref[...] = acc.astype(o_ref.dtype)


_DATA_BUDGET_BYTES = 28 << 20   # double-buffered BlockSpec data (all streams)
_VMEM_LIMIT_CAP = 44 << 20      # >= 20 MiB headroom on v7x's 64 MiB VMEM


def _round_up(x, m):
    return ((x + m - 1) // m) * m


def _choose_tiles(rows, h, n_layers, in_bytes, out_bytes, budget):
    """Pick (tile_rows, tile_h) whose double-buffered working set fits `budget`
    and whose grid has >= 2 parallel steps whenever the problem allows."""
    align = 16 if min(in_bytes, out_bytes) < 4 else 8
    per_cell = 2 * (n_layers * in_bytes + out_bytes)        # double-buffered
    h_padded = _round_up(h, 128)
    rows_padded = _round_up(rows, align)

    if per_cell * align * h_padded <= budget:
        # Full-H tiles; the byte budget (not a row count) sets the tile size.
        tile_h = h
        tile_rows = (budget // (per_cell * h_padded)) // align * align
        tile_rows = max(align, min(tile_rows, rows_padded))
    else:
        # Very large H: tile the lane axis too (multiples of 128 keep the
        # output stores lane-dense and the working set inside VMEM).
        tile_h = (budget // (per_cell * align)) // 128 * 128
        tile_h = max(128, min(tile_h, h_padded))
        tile_rows = (budget // (per_cell * tile_h)) // align * align
        tile_rows = max(align, min(tile_rows, rows_padded))

    # Megacore: ensure >= 2 grid steps so both v7x TensorCores get work,
    # unless the whole problem is a single alignment-sized tile.
    n_row = -(-rows // tile_rows)
    n_h = 1 if tile_h >= h else -(-h // tile_h)
    if n_row * n_h == 1 and rows > align:
        tile_rows = max(align, _round_up(-(-rows // 2), align))
    return tile_rows, tile_h


def scalar_mix(tensors, weights, scale, *, tile_rows=None, tile_h=None):
    """Pallas ScalarMix: gamma * sum_k softmax(w)_k * tensor_k.

    tensors: list of N arrays, each [B, S, H], same shape/dtype.
    weights: [N] unnormalized layer weights (softmax applied here, as in torch).
    scale:   [1] gamma.
    """
    if not tensors:
        raise ValueError("ScalarMix needs at least one input tensor.")
    n_layers = len(tensors)
    b, s, h = tensors[0].shape
    dtype = tensors[0].dtype
    for t in tensors[1:]:
        if t.shape != tensors[0].shape or t.dtype != dtype:
            raise ValueError(
                "All ScalarMix inputs must share shape and dtype; got "
                f"{t.shape}/{t.dtype} vs {tensors[0].shape}/{dtype}.")
    rows = b * s
    in_bytes = jnp.dtype(dtype).itemsize
    out_bytes = in_bytes

    # Free layout glue: [B,S,H] -> [rows,H] views (no stack, no extra HBM pass).
    xs = [t.reshape(rows, h) for t in tensors]

    # Parameter glue: softmax over the N scalar weights, gamma folded in so the
    # kernel is a pure scalar*vreg multiply-add loop (VPU only, no MXU).
    # TODO(synk): torch's training-time layer-weight dropout (unnormalized
    # weight -> -inf with prob p) is not implemented; eval / dropout=0 semantics.
    normed_w = jax.nn.softmax(weights.astype(jnp.float32), axis=-1)
    w_eff = (scale.astype(jnp.float32).reshape(()) * normed_w).reshape((n_layers,))

    auto_rows, auto_h = _choose_tiles(rows, h, n_layers, in_bytes, out_bytes,
                                      _DATA_BUDGET_BYTES)
    tile_rows = auto_rows if tile_rows is None else int(tile_rows)
    tile_h = auto_h if tile_h is None else int(tile_h)

    # VMEM accounting: double-buffered (N inputs + 1 output) tiles, lane axis
    # padded to 128.
    tile_h_padded = _round_up(min(tile_h, h), 128)
    needed_vmem = 2 * (n_layers * in_bytes + out_bytes) * tile_rows * tile_h_padded
    if needed_vmem > _VMEM_LIMIT_CAP:
        raise ValueError(
            f"tile_rows={tile_rows}, tile_h={tile_h} needs ~{needed_vmem >> 20} "
            f"MiB of double-buffered VMEM, above the {_VMEM_LIMIT_CAP >> 20} MiB "
            "cap (v7x has 64 MiB per TensorCore). Use smaller tiles or let the "
            "kernel choose them.")
    vmem_limit = int(min(needed_vmem + (8 << 20), _VMEM_LIMIT_CAP))

    grid = (pl.cdiv(rows, tile_rows), pl.cdiv(h, tile_h))
    kernel = functools.partial(_scalar_mix_kernel, n_layers=n_layers)

    tile_spec = pl.BlockSpec((tile_rows, tile_h), lambda i, j: (i, j))
    out = pl.pallas_call(
        kernel,
        out_shape=jax.ShapeDtypeStruct((rows, h), dtype),
        grid_spec=pl.GridSpec(
            grid=grid,
            in_specs=[pl.BlockSpec(memory_space=pltpu.MemorySpace.SMEM)]
                     + [tile_spec] * n_layers,
            out_specs=tile_spec,
        ),
        compiler_params=pltpu.CompilerParams(
            dimension_semantics=("parallel", "parallel"),
            vmem_limit_bytes=vmem_limit),
    )(w_eff, *xs)

    return out.reshape(b, s, h)


if __name__ == "__main__":
    key = jax.random.PRNGKey(0)

    # --- Test 1: default tiling (grid splits rows into >= 2 parallel steps) ---
    n_layers, B, S, H = 3, 2, 8, 128
    keys = jax.random.split(key, n_layers)
    tensors = [jax.random.normal(k, (B, S, H), dtype=jnp.float32) for k in keys]
    weights = jnp.arange(n_layers, dtype=jnp.float32) * 0.5   # [N]
    scale = jnp.array([1.25], dtype=jnp.float32)              # [1]

    out = jax.block_until_ready(scalar_mix(tensors, weights, scale))
    nw = jax.nn.softmax(weights)
    ref = scale[0] * sum(w * t for w, t in zip(nw, tensors))
    assert out.shape == (B, S, H)
    assert jnp.allclose(out, ref, atol=1e-5, rtol=1e-5)

    # --- Test 2: exercise the 2-D (row, H) tiled path explicitly ---
    n_layers2, B2, S2, H2 = 4, 2, 8, 256
    keys2 = jax.random.split(jax.random.PRNGKey(1), n_layers2)
    tensors2 = [jax.random.normal(k, (B2, S2, H2), dtype=jnp.float32)
                for k in keys2]
    weights2 = jnp.linspace(-1.0, 1.0, n_layers2, dtype=jnp.float32)
    scale2 = jnp.array([0.75], dtype=jnp.float32)

    out2 = jax.block_until_ready(
        scalar_mix(tensors2, weights2, scale2, tile_rows=8, tile_h=128))
    nw2 = jax.nn.softmax(weights2)
    ref2 = scale2[0] * sum(w * t for w, t in zip(nw2, tensors2))
    assert out2.shape == (B2, S2, H2)
    assert jnp.allclose(out2, ref2, atol=1e-5, rtol=1e-5)

    print("KERNEL_OK")
</pallas_src>

<mosaic_0001>
module attributes {stable_mosaic.version = 11 : i64} {
  func.func @_scalar_mix_kernel(%arg0: i32, %arg1: i32, %arg2: memref<3xf32, #tpu.memory_space<smem>>, %arg3: memref<8x128xf32, #tpu.memory_space<vmem>>, %arg4: memref<8x128xf32, #tpu.memory_space<vmem>>, %arg5: memref<8x128xf32, #tpu.memory_space<vmem>>, %arg6: memref<8x128xf32, #tpu.memory_space<vmem>>) attributes {dimension_semantics = [#tpu.dimension_semantics<parallel>, #tpu.dimension_semantics<parallel>], iteration_bounds = array<i64: 2, 1>, scalar_prefetch = 0 : i64, scratch_operands = 0 : i64, tpu.core_type = #tpu.core_type<tc>, window_params = [{transform_indices = @transform_0, window_bounds = array<i64: 3>}, {transform_indices = @transform_1, window_bounds = array<i64: 8, 128>}, {transform_indices = @transform_2, window_bounds = array<i64: 8, 128>}, {transform_indices = @transform_3, window_bounds = array<i64: 8, 128>}, {transform_indices = @transform_4, window_bounds = array<i64: 8, 128>}]} {
    %c0 = arith.constant 0 : index
    %0 = memref.load %arg2[%c0] : memref<3xf32, #tpu.memory_space<smem>>
    %c0_0 = arith.constant 0 : index
    %c0_1 = arith.constant 0 : index
    %1 = vector.load %arg3[%c0_0, %c0_1] : memref<8x128xf32, #tpu.memory_space<vmem>>, vector<8x128xf32>
    %2 = vector.broadcast %0 : f32 to vector<8x128xf32>
    %3 = arith.mulf %2, %1 : vector<8x128xf32>
    %c1 = arith.constant 1 : index
    %4 = memref.load %arg2[%c1] : memref<3xf32, #tpu.memory_space<smem>>
    %c0_2 = arith.constant 0 : index
    %c0_3 = arith.constant 0 : index
    %5 = vector.load %arg4[%c0_2, %c0_3] : memref<8x128xf32, #tpu.memory_space<vmem>>, vector<8x128xf32>
    %6 = vector.broadcast %4 : f32 to vector<8x128xf32>
    %7 = arith.mulf %6, %5 : vector<8x128xf32>
    %c2 = arith.constant 2 : index
    %8 = memref.load %arg2[%c2] : memref<3xf32, #tpu.memory_space<smem>>
    %c0_4 = arith.constant 0 : index
    %c0_5 = arith.constant 0 : index
    %9 = vector.load %arg5[%c0_4, %c0_5] : memref<8x128xf32, #tpu.memory_space<vmem>>, vector<8x128xf32>
    %10 = vector.broadcast %8 : f32 to vector<8x128xf32>
    %11 = arith.mulf %10, %9 : vector<8x128xf32>
    %12 = arith.addf %3, %11 : vector<8x128xf32>
    %13 = arith.addf %12, %7 : vector<8x128xf32>
    %c0_6 = arith.constant 0 : index
    %c0_7 = arith.constant 0 : index
    %14 = vector.load %arg6[%c0_6, %c0_7] : memref<8x128xf32, #tpu.memory_space<vmem>>, vector<8x128xf32>
    tpu.vector_store %arg6[%c0_6, %c0_7], %13 {strides = array<i32>} : memref<8x128xf32, #tpu.memory_space<vmem>>, vector<8x128xf32>,
    return
  }
  func.func @transform_0(%arg0: i32, %arg1: i32) -> i32 {
    %c0_i32 = arith.constant 0 : i32
    %c0_i32_0 = arith.constant 0 : i32
    return %c0_i32 : i32
  }
  func.func @transform_1(%arg0: i32, %arg1: i32) -> (i32, i32) {
    %c0_i32 = arith.constant 0 : i32
    return %arg0, %arg1 : i32, i32
  }
  func.func @transform_2(%arg0: i32, %arg1: i32) -> (i32, i32) {
    %c0_i32 = arith.constant 0 : i32
    return %arg0, %arg1 : i32, i32
  }
  func.func @transform_3(%arg0: i32, %arg1: i32) -> (i32, i32) {
    %c0_i32 = arith.constant 0 : i32
    return %arg0, %arg1 : i32, i32
  }
  func.func @transform_4(%arg0: i32, %arg1: i32) -> (i32, i32) {
    %c0_i32 = arith.constant 0 : i32
    return %arg0, %arg1 : i32, i32
  }
}

</mosaic_0001>

<llo_original>
// kernel: tpu_custom_call.1
$region0: #{tpu_custom_call.1}
  #allocation0 [shape = 'u32[]', space=smem, size = 0x4, offset = 0x4, fixed_abs, tag = 'smem constant byte address 0x4 - core index']
  #allocation1 [shape = 'u32[144,128]{1,0:T(1,128)}', space=vmem, size = 0x12000, scoped, tag = 'internal scratch']
  %s0 = inlined_call_operand.hbm [shape: f32[3], index: 0, kind: input, shape index: {}]
  %s1 = inlined_call_operand.hbm [shape: f32[16,128], index: 1, kind: input, shape index: {}]
  %s2 = inlined_call_operand.hbm [shape: f32[16,128], index: 2, kind: input, shape index: {}]
  %s3 = inlined_call_operand.hbm [shape: f32[16,128], index: 3, kind: input, shape index: {}]
  %s4 = inlined_call_operand.hbm [shape: f32[16,128], index: 4, kind: output, shape index: {}]
  %s5 = sld [smem:[#allocation0]]
  $region65: #{tpu_custom_call.1} parent=0
    _
  %s7 = ssub.s32 1, %s5
  %s8 = scalar_select 0, %s7, %s5
  $region1: #{tpu_custom_call.1} parent=0
    #allocation2 [shape = 'u8[512]{0}', space=smem, size = 0x200, scoped, tag = 'input window, operand 0, single buffered']
    #allocation3 [shape = 's32[2]{0}', space=sflag, size = 0x8, scoped, tag = 'scoped memory for tpu_custom_call.1']
    #allocation4 [shape = 's32[2]{0}', space=sflag, size = 0x8, scoped, tag = 'scoped memory for tpu_custom_call.1']
    #allocation5 [shape = 's32[2]{0}', space=sflag, size = 0x8, scoped, tag = 'scoped memory for tpu_custom_call.1']
    #allocation6 [shape = 'u8[8192]{0}', space=vmem, size = 0x2000, scoped, tag = 'input window, operand 1']
    #allocation7 [shape = 'u8[8192]{0}', space=vmem, size = 0x2000, scoped, tag = 'input window, operand 2']
    #allocation8 [shape = 's32[2]{0}', space=sflag, size = 0x8, scoped, tag = 'scoped memory for tpu_custom_call.1']
    #allocation9 [shape = 'u8[8192]{0}', space=vmem, size = 0x2000, scoped, tag = 'input window, operand 3']
    #allocation10 [shape = 'u8[8192]{0}', space=vmem, size = 0x2000, scoped, tag = 'output window, operand 0']
    %9 = vsyncpa [#allocation5], 0
    %10 = vsyncpa [#allocation3], 0
    %s11 = scalar_lea.sflag [#allocation3], 1
    %12 = vsyncpa %s11, 0
    %13 = vsyncpa [#allocation8], 0
    %s14 = scalar_lea.sflag [#allocation8], 1
    %15 = vsyncpa %s14, 0
    %16 = vsyncpa [#allocation4], 0
    %s17 = scalar_lea.sflag [#allocation4], 1
    %18 = vsyncpa %s17, 0
    loop: start=0, step=1, limit=4
    $region2: #{tpu_custom_call.1} parent=1 // loop_pre_header
      _
    $region3: #{tpu_custom_call.1} parent=1 // loop_header
      %s20 = sphi 0, %s24
      %p21 = scmp.ge.s32.totalorder %s20, 4
      %s27 = sphi 0, %s39
      %s28 = sphi 0, %s35
      %s29 = sphi 0, %s27
      %s30 = sphi 0, %s28
      %s31 = sphi 0, %s29
      %s32 = sphi 0, %s30
      %s40 = sphi 0, %s40
      %s42 = sphi 0, %s40
      %s43 = sphi 0, %s42
      %s57 = sphi 0, %s43
      %s65 = sphi 0, %s67
      %s68 = sphi 0, %s65
      %s69 = sphi 0, %s68
      %s85 = sphi 0, %s69
      %s93 = sphi 0, %s95
      %s96 = sphi 0, %s93
      %s97 = sphi 0, %s96
      %s113 = sphi 0, %s97
      %s121 = sphi 0, %s123
      %s124 = sphi 0, %s121
      %s125 = sphi 0, %s124
      %s141 = sphi 0, %s125
      %s149 = sphi 0, %s151
      %s152 = sphi 0, %s149
      %s153 = sphi 0, %s152
      %s169 = sphi 0, %s153
    $region4: #{tpu_custom_call.1} parent=1 // loop_header_branch
      %23 = sbr.rel (%p21) target = $region8
    $region5: #{tpu_custom_call.1} parent=1 // loop_body
      %s25 = ssub.s32 %s20, 1
      %s26 = ssub.s32 %s20, 2
      %s33 = sadd.s32 1, %s28
      %p34 = scmp.ge.s32.totalorder %s33, 1
      %s35 = scalar_select %p34, 0, %s33
      %s36 = sadd.s32 1, %s27
      %s37 = scalar_select %p34, %s36, %s27
      %p38 = scmp.ge.s32.totalorder %s37, 2
      %s39 = scalar_select %p38, 0, %s37
      %s41 = sadd.s32 %s40, 1
      %p44 = scmp.eq.s32.totalorder %s20, 1
      %p45 = scmp.ne.s32.totalorder %s40, %s42
      %p46 = scmp.eq.s32.totalorder %s20, 0
      %p47 = por %p45, %p46
      %p48 = scmp.ne.s32.totalorder %s40, %s42
      %p49 = scmp.eq.s32.totalorder %s25, 1
      %p50 = por %p48, %p49
      %p51 = scmp.ne.s32.totalorder %s42, %s43
      %p52 = scmp.eq.s32.totalorder %s25, 0
      %p53 = por %p51, %p52
      %p54 = scmp.ne.s32.totalorder %s42, %s43
      %p55 = scmp.eq.s32.totalorder %s26, 1
      %p56 = por %p54, %p55
      %p58 = scmp.ne.s32.totalorder %s43, %s57
      %p59 = scmp.eq.s32.totalorder %s26, 0
      %p60 = por %p58, %p59
      %s61 = ssub.s32 %s27, %s39
      %s62 = ssub.s32 %s28, %s35
      %s63 = sor.u32 %s61, %s62
      %p64 = scmp.eq.s32.totalorder %s63, 0
      %s66 = sadd.s32 %s65, 1
      %s67 = scalar_select %p64, %s65, %s66
      %p70 = pneg %p64
      %p71 = scmp.eq.s32.totalorder %s20, 1
      %p72 = por %p70, %p71
      %p73 = scmp.ne.s32.totalorder %s65, %s68
      %p74 = scmp.eq.s32.totalorder %s20, 0
      %p75 = por %p73, %p74
      %p76 = scmp.ne.s32.totalorder %s65, %s68
      %p77 = scmp.eq.s32.totalorder %s25, 1
      %p78 = por %p76, %p77
      %p79 = scmp.ne.s32.totalorder %s68, %s69
      %p80 = scmp.eq.s32.totalorder %s25, 0
      %p81 = por %p79, %p80
      %p82 = scmp.ne.s32.totalorder %s68, %s69
      %p83 = scmp.eq.s32.totalorder %s26, 1
      %p84 = por %p82, %p83
      %p86 = scmp.ne.s32.totalorder %s69, %s85
      %p87 = scmp.eq.s32.totalorder %s26, 0
      %p88 = por %p86, %p87
      %s89 = ssub.s32 %s27, %s39
      %s90 = ssub.s32 %s28, %s35
      %s91 = sor.u32 %s89, %s90
      %p92 = scmp.eq.s32.totalorder %s91, 0
      %s94 = sadd.s32 %s93, 1
      %s95 = scalar_select %p92, %s93, %s94
      %p98 = pneg %p92
      %p99 = scmp.eq.s32.totalorder %s20, 1
      %p100 = por %p98, %p99
      %p101 = scmp.ne.s32.totalorder %s93, %s96
      %p102 = scmp.eq.s32.totalorder %s20, 0
      %p103 = por %p101, %p102
      %p104 = scmp.ne.s32.totalorder %s93, %s96
      %p105 = scmp.eq.s32.totalorder %s25, 1
      %p106 = por %p104, %p105
      %p107 = scmp.ne.s32.totalorder %s96, %s97
      %p108 = scmp.eq.s32.totalorder %s25, 0
      %p109 = por %p107, %p108
      %p110 = scmp.ne.s32.totalorder %s96, %s97
      %p111 = scmp.eq.s32.totalorder %s26, 1
      %p112 = por %p110, %p111
      %p114 = scmp.ne.s32.totalorder %s97, %s113
      %p115 = scmp.eq.s32.totalorder %s26, 0
      %p116 = por %p114, %p115
      %s117 = ssub.s32 %s27, %s39
      %s118 = ssub.s32 %s28, %s35
      %s119 = sor.u32 %s117, %s118
      %p120 = scmp.eq.s32.totalorder %s119, 0
      %s122 = sadd.s32 %s121, 1
      %s123 = scalar_select %p120, %s121, %s122
      %p126 = pneg %p120
      %p127 = scmp.eq.s32.totalorder %s20, 1
      %p128 = por %p126, %p127
      %p129 = scmp.ne.s32.totalorder %s121, %s124
      %p130 = scmp.eq.s32.totalorder %s20, 0
      %p131 = por %p129, %p130
      %p132 = scmp.ne.s32.totalorder %s121, %s124
      %p133 = scmp.eq.s32.totalorder %s25, 1
      %p134 = por %p132, %p133
      %p135 = scmp.ne.s32.totalorder %s124, %s125
      %p136 = scmp.eq.s32.totalorder %s25, 0
      %p137 = por %p135, %p136
      %p138 = scmp.ne.s32.totalorder %s124, %s125
      %p139 = scmp.eq.s32.totalorder %s26, 1
      %p140 = por %p138, %p139
      %p142 = scmp.ne.s32.totalorder %s125, %s141
      %p143 = scmp.eq.s32.totalorder %s26, 0
      %p144 = por %p142, %p143
      %s145 = ssub.s32 %s27, %s39
      %s146 = ssub.s32 %s28, %s35
      %s147 = sor.u32 %s145, %s146
      %p148 = scmp.eq.s32.totalorder %s147, 0
      %s150 = sadd.s32 %s149, 1
      %s151 = scalar_select %p148, %s149, %s150
      %p154 = pneg %p148
      %p155 = scmp.eq.s32.totalorder %s20, 1
      %p156 = por %p154, %p155
      %p157 = scmp.ne.s32.totalorder %s149, %s152
      %p158 = scmp.eq.s32.totalorder %s20, 0
      %p159 = por %p157, %p158
      %p160 = scmp.ne.s32.totalorder %s149, %s152
      %p161 = scmp.eq.s32.totalorder %s25, 1
      %p162 = por %p160, %p161
      %p163 = scmp.ne.s32.totalorder %s152, %s153
      %p164 = scmp.eq.s32.totalorder %s25, 0
      %p165 = por %p163, %p164
      %p166 = scmp.ne.s32.totalorder %s152, %s153
      %p167 = scmp.eq.s32.totalorder %s26, 1
      %p168 = por %p166, %p167
      %p170 = scmp.ne.s32.totalorder %s153, %s169
      %p171 = scmp.eq.s32.totalorder %s26, 0
      %p172 = por %p170, %p171
      %p173 = scmp.le.s32.totalorder 1, %s20
      %p174 = scmp.lt.s32.totalorder %s20, 3
      %p175 = pnand %p173, %p174
      %p176 = pneg %p175
      // Predicated region
      $region9: #{tpu_custom_call.1} parent=5 // pred_check
        _
      $region10: #{tpu_custom_call.1} parent=5 // pred_check_branch
        %178 = sbr.rel (%p175) target = $region12
      $region11: #{tpu_custom_call.1} parent=5 // pred_region
        %s179 = ssub.s32 %s20, 1
        // Predicated region
        $region13: #{tpu_custom_call.1} parent=11 // pred_check
          %p180 = pneg %p53
        $region14: #{tpu_custom_call.1} parent=11 // pred_check_branch
          %182 = sbr.rel (%p180) target = $region16
        $region15: #{tpu_custom_call.1} parent=11 // pred_region
          %s184 = ssub.s32 16, 16
          %185 = vsyncadd [#allocation5], %s184
          %188 = dma.hbm_to_smem %s0, 16, [#allocation2], [#allocation5]
        $region16: #{tpu_custom_call.1} parent=11 // pred_fallthru
          _
      $region12: #{tpu_custom_call.1} parent=5 // pred_fallthru
        _
      %p189 = scmp.lt.s32.totalorder %s20, 2
      // Predicated region
      $region17: #{tpu_custom_call.1} parent=5 // pred_check
        %p190 = pneg %p189
      $region18: #{tpu_custom_call.1} parent=5 // pred_check_branch
        %192 = sbr.rel (%p190) target = $region20
      $region19: #{tpu_custom_call.1} parent=5 // pred_region
        // Predicated region
        $region21: #{tpu_custom_call.1} parent=19 // pred_check
          %p193 = pneg %p75
        $region22: #{tpu_custom_call.1} parent=19 // pred_check_branch
          %195 = sbr.rel (%p193) target = $region24
        $region23: #{tpu_custom_call.1} parent=19 // pred_region
          %s196 = sand.u32 %s65, 1
          %s197 = scalar_lea.sflag [#allocation3], %s196
          %s198 = sand.u32 %s65, 1
          %s199 = smul.addr %s198, 8
          %s200 = scalar_lea.vmem [#allocation6], %s199
          %s202 = ssub.s32 128, 128
          %203 = vsyncadd %s197, %s202
          %s204 = sadd.s32 %s28, %s27
          %s205 = smul.addr %s204, 128
          %s206 = scalar_lea.hbm %s1, %s205
          %s208 = sshll.u32 %s200, 4
          %s209 = int_to_ptr.vmem [resolvable:$true] %s208
          %211 = dma.hbm_to_vmem [thread:$0]  %s206, 128, %s209, %s197
        $region24: #{tpu_custom_call.1} parent=19 // pred_fallthru
          _
        // Predicated region
        $region25: #{tpu_custom_call.1} parent=19 // pred_check
          %p212 = pneg %p103
        $region26: #{tpu_custom_call.1} parent=19 // pred_check_branch
          %214 = sbr.rel (%p212) target = $region28
        $region27: #{tpu_custom_call.1} parent=19 // pred_region
          %s215 = sand.u32 %s20, 1
          %s216 = scalar_lea.sflag [#allocation8], %s215
          %s217 = sand.u32 %s93, 1
          %s218 = smul.addr %s217, 8
          %s219 = scalar_lea.vmem [#allocation7], %s218
          %s221 = ssub.s32 128, 128
          %222 = vsyncadd %s216, %s221
          %s223 = sadd.s32 %s28, %s27
          %s224 = smul.addr %s223, 128
          %s225 = scalar_lea.hbm %s2, %s224
          %s227 = sshll.u32 %s219, 4
          %s228 = int_to_ptr.vmem [resolvable:$true] %s227
          %230 = dma.hbm_to_vmem [thread:$0]  %s225, 128, %s228, %s216
        $region28: #{tpu_custom_call.1} parent=19 // pred_fallthru
          _
        // Predicated region
        $region29: #{tpu_custom_call.1} parent=19 // pred_check
          %p231 = pneg %p131
        $region30: #{tpu_custom_call.1} parent=19 // pred_check_branch
          %233 = sbr.rel (%p231) target = $region32
        $region31: #{tpu_custom_call.1} parent=19 // pred_region
          %s234 = sand.u32 %s20, 1
          %s235 = scalar_lea.sflag [#allocation8], %s234
          %s236 = sand.u32 %s121, 1
          %s237 = smul.addr %s236, 8
          %s238 = scalar_lea.vmem [#allocation9], %s237
          %s240 = ssub.s32 128, 128
          %241 = vsyncadd %s235, %s240
          %s242 = sadd.s32 %s28, %s27
          %s243 = smul.addr %s242, 128
          %s244 = scalar_lea.hbm %s3, %s243
          %s246 = sshll.u32 %s238, 4
          %s247 = int_to_ptr.vmem [resolvable:$true] %s246
          %249 = dma.hbm_to_vmem [thread:$0]  %s244, 128, %s247, %s235
        $region32: #{tpu_custom_call.1} parent=19 // pred_fallthru
          _
      $region20: #{tpu_custom_call.1} parent=5 // pred_fallthru
        _
      %p250 = scmp.le.s32.totalorder 1, %s20
      %p251 = scmp.lt.s32.totalorder %s20, 3
      %p252 = pnand %p250, %p251
      %p253 = pneg %p252
      // Predicated region
      $region33: #{tpu_custom_call.1} parent=5 // pred_check
        _
      $region34: #{tpu_custom_call.1} parent=5 // pred_check_branch
        %255 = sbr.rel (%p252) target = $region36
      $region35: #{tpu_custom_call.1} parent=5 // pred_region
        %s256 = ssub.s32 %s20, 1
        // Predicated region
        $region37: #{tpu_custom_call.1} parent=35 // pred_check
          %p257 = pneg %p53
        $region38: #{tpu_custom_call.1} parent=35 // pred_check_branch
          %259 = sbr.rel (%p257) target = $region40
        $region39: #{tpu_custom_call.1} parent=35 // pred_region
          %260 = dma.done [#allocation5], 16
        $region40: #{tpu_custom_call.1} parent=35 // pred_fallthru
          _
        %s261 = sand.u32 %s68, 1
        %s262 = scalar_lea.sflag [#allocation3], %s261
        %s263 = sand.u32 %s68, 1
        %s264 = smul.addr %s263, 8
        %s265 = scalar_lea.vmem [#allocation6], %s264
        // Predicated region
        $region41: #{tpu_custom_call.1} parent=35 // pred_check
          %p266 = pneg %p81
        $region42: #{tpu_custom_call.1} parent=35 // pred_check_branch
          %268 = sbr.rel (%p266) target = $region44
        $region43: #{tpu_custom_call.1} parent=35 // pred_region
          %269 = dma.done %s262, 128
        $region44: #{tpu_custom_call.1} parent=35 // pred_fallthru
          _
        %s270 = sand.u32 %s25, 1
        %s271 = scalar_lea.sflag [#allocation8], %s270
        %s272 = sand.u32 %s96, 1
        %s273 = smul.addr %s272, 8
        %s274 = scalar_lea.vmem [#allocation7], %s273
        // Predicated region
        $region45: #{tpu_custom_call.1} parent=35 // pred_check
          %p275 = pneg %p109
        $region46: #{tpu_custom_call.1} parent=35 // pred_check_branch
          %277 = sbr.rel (%p275) target = $region48
        $region47: #{tpu_custom_call.1} parent=35 // pred_region
          %278 = dma.done %s271, 128
        $region48: #{tpu_custom_call.1} parent=35 // pred_fallthru
          _
        %s279 = sand.u32 %s25, 1
        %s280 = scalar_lea.sflag [#allocation8], %s279
        %s281 = sand.u32 %s124, 1
        %s282 = smul.addr %s281, 8
        %s283 = scalar_lea.vmem [#allocation9], %s282
        // Predicated region
        $region49: #{tpu_custom_call.1} parent=35 // pred_check
          %p284 = pneg %p137
        $region50: #{tpu_custom_call.1} parent=35 // pred_check_branch
          %286 = sbr.rel (%p284) target = $region52
        $region51: #{tpu_custom_call.1} parent=35 // pred_region
          %287 = dma.done %s280, 128
        $region52: #{tpu_custom_call.1} parent=35 // pred_fallthru
          _
        %288 = sfence
        %p289 = pneg %p53
        %p290 = pneg %p50
        %s291 = sand.u32 %s68, 1
        %s292 = scalar_lea.sflag [#allocation3], %s291
        %s293 = sand.u32 %s68, 1
        %s294 = smul.addr %s293, 8
        %s295 = scalar_lea.vmem [#allocation6], %s294
        %p296 = pneg %p81
        %p297 = pneg %p78
        %s298 = sand.u32 %s25, 1
        %s299 = scalar_lea.sflag [#allocation8], %s298
        %s300 = sand.u32 %s96, 1
        %s301 = smul.addr %s300, 8
        %s302 = scalar_lea.vmem [#allocation7], %s301
        %p303 = pneg %p109
        %p304 = pneg %p106
        %s305 = sand.u32 %s25, 1
        %s306 = scalar_lea.sflag [#allocation8], %s305
        %s307 = sand.u32 %s124, 1
        %s308 = smul.addr %s307, 8
        %s309 = scalar_lea.vmem [#allocation9], %s308
        %p310 = pneg %p137
        %p311 = pneg %p134
        %p312 = pneg %p165
        %p313 = pneg %p162
        %s314 = sand.u32 %s152, 1
        %s315 = scalar_lea.sflag [#allocation4], %s314
        %s316 = sand.u32 %s152, 1
        %s317 = smul.addr %s316, 8
        %s318 = scalar_lea.vmem [#allocation10], %s317
        %s319 = sld [smem:[#allocation2]]
        %v320 = vld [vmem:[%s265] sm:$0xff]
        %v321 = vstv %s319
        %v322 = vmul.f32 %v321, %v320
        %s323 = sld [smem:[#allocation2 + $0x1]]
        %v324 = vld [vmem:[%s274] sm:$0xff]
        %v325 = vstv %s323
        %v326 = vmul.f32 %v325, %v324
        %s327 = sld [smem:[#allocation2 + $0x2]]
        %v328 = vld [vmem:[%s283] sm:$0xff]
        %v329 = vstv %s327
        %v330 = vmul.f32 %v329, %v328
        %v331 = vadd.f32 %v322, %v330
        %v332 = vadd.f32 %v331, %v326
        %333 = vst [vmem:[%s318] sm:$0xff] %v332
        %s334 = sand.u32 %s152, 1
        %s335 = scalar_lea.sflag [#allocation4], %s334
        %s336 = sand.u32 %s152, 1
        %s337 = smul.addr %s336, 8
        %s338 = scalar_lea.vmem [#allocation10], %s337
        // Predicated region
        $region53: #{tpu_custom_call.1} parent=35 // pred_check
          %p339 = pneg %p162
        $region54: #{tpu_custom_call.1} parent=35 // pred_check_branch
          %341 = sbr.rel (%p339) target = $region56
        $region55: #{tpu_custom_call.1} parent=35 // pred_region
          %s343 = ssub.s32 128, 128
          %344 = vsyncadd %s335, %s343
          %s345 = sadd.s32 %s30, %s29
          %s346 = smul.addr %s345, 128
          %s347 = scalar_lea.hbm %s4, %s346
          %s349 = sshll.u32 %s338, 4
          %s350 = int_to_ptr.vmem [resolvable:$true] %s349
          %352 = dma.vmem_to_hbm [thread:$0]  %s350, 128, %s347, %s335
        $region56: #{tpu_custom_call.1} parent=35 // pred_fallthru
          _
      $region36: #{tpu_custom_call.1} parent=5 // pred_fallthru
        _
      %p353 = scmp.le.s32.totalorder 2, %s20
      // Predicated region
      $region57: #{tpu_custom_call.1} parent=5 // pred_check
        %p354 = pneg %p353
      $region58: #{tpu_custom_call.1} parent=5 // pred_check_branch
        %356 = sbr.rel (%p354) target = $region60
      $region59: #{tpu_custom_call.1} parent=5 // pred_region
        %s357 = ssub.s32 %s20, 2
        // Predicated region
        $region61: #{tpu_custom_call.1} parent=59 // pred_check
          %p358 = pneg %p168
        $region62: #{tpu_custom_call.1} parent=59 // pred_check_branch
          %360 = sbr.rel (%p358) target = $region64
        $region63: #{tpu_custom_call.1} parent=59 // pred_region
          %s361 = sand.u32 %s153, 1
          %s362 = scalar_lea.sflag [#allocation4], %s361
          %s363 = sand.u32 %s153, 1
          %s364 = smul.addr %s363, 8
          %s365 = scalar_lea.vmem [#allocation10], %s364
          %366 = dma.done %s362, 128
        $region64: #{tpu_custom_call.1} parent=59 // pred_fallthru
          _
      $region60: #{tpu_custom_call.1} parent=5 // pred_fallthru
        _
    $region6: #{tpu_custom_call.1} parent=1 // loop_footer
      %s24 = sadd.s32 1, %s20
    $region7: #{tpu_custom_call.1} parent=1 // loop_footer_branch
      %19 = sbr.rel target = $region3
    $region8: #{tpu_custom_call.1} parent=1 // loop_exit
      _
    %367 = vsyncpa [#allocation3], 1
    %s368 = scalar_lea.sflag [#allocation3], 1
    %369 = vsyncpa %s368, 1
    %370 = vsyncpa [#allocation8], 1
    %s371 = scalar_lea.sflag [#allocation8], 1
    %372 = vsyncpa %s371, 1
    %373 = vsyncpa [#allocation4], 1
    %s374 = scalar_lea.sflag [#allocation4], 1
    %375 = vsyncpa %s374, 1
    %376 = vsyncpa [#allocation5], 1
    %s377 = scalar_lea.sflag [#allocation5], 1
    %378 = vsyncpa %s377, 1

</llo_original>
